<compile_context>
chip_gen: v7x
topology: tpu7x:2x2x1
jax: 0.10.0
libtpu: 0.0.40
codegen_flags: <defaults>
</compile_context>

<pallas_src>
import functools

import jax
import jax.numpy as jnp
from jax.experimental import pallas as pl
from jax.experimental.pallas import tpu as pltpu

_VMEM_LIMIT_BYTES = 32 * 1024 * 1024      # scoped-VMEM limit requested from Mosaic
_IN_DBUF_BUDGET = 16 * 1024 * 1024        # budget for the double-buffered input tiles
_HBM_TARGET_PER_STEP = 4 * 1024 * 1024    # target logit bytes moved per grid step


def _nce_softmax_loss_kernel(x_ref, o_ref, *, valid_rows_last, need_mask):
    """x_ref: (tile_b, C) logits tile (native dtype); o_ref: (1, 8, 1) partial sum."""
    x = x_ref[...].astype(jnp.float32)                        # (TB, C), cast on the VPU

    # Numerically stable logsumexp over the class (lane) axis.
    m = jnp.max(x, axis=-1, keepdims=True)                    # (TB, 1)
    lse = m + jnp.log(jnp.sum(jnp.exp(x - m), axis=-1, keepdims=True))
    per_row = lse - x[:, 0:1]                                 # label == 0  ->  (TB, 1)

    def write_partial(v):
        # VPU adds across the tile's vregs + one tiny sublane reduce per tile.
        # The partial lands in element [0, 0, 0]; the rest of the block is 0,
        # so the wrapper can safely sum the entire partials array.
        part = jnp.sum(v)
        sub = jax.lax.broadcasted_iota(jnp.int32, o_ref.shape, 1)
        o_ref[...] = jnp.where(sub == 0, part, 0.0)

    if need_mask:
        last = pl.num_programs(0) - 1

        @pl.when(pl.program_id(0) == last)
        def _():
            # Ragged last tile: zero the garbage rows before summing.
            row = jax.lax.broadcasted_iota(jnp.int32, per_row.shape, 0)
            write_partial(jnp.where(row < valid_rows_last, per_row, 0.0))

        @pl.when(pl.program_id(0) != last)
        def _():
            write_partial(per_row)
    else:
        write_partial(per_row)


def nce_softmax_loss(x, *, tile_b=None):
    """x: [bsz, n_cls, 1] (or [bsz, n_cls]) logits -> scalar f32 loss."""
    # Match torch's intent but squeeze ONLY the trailing size-1 axis
    # (plain .squeeze() would also drop bsz==1 and break the [B, C] layout).
    if x.ndim == 3 and x.shape[-1] == 1:
        x2 = x[..., 0]
    elif x.ndim == 2:
        x2 = x
    else:
        raise ValueError(f"expected [bsz, n_cls, 1] or [bsz, n_cls], got {x.shape}")
    B, C = x2.shape
    itemsize = jnp.dtype(x2.dtype).itemsize
    lane_c = pl.cdiv(C, 128) * 128          # VMEM lane padding of the class axis

    # TODO(synk): the class axis is not tiled; assumes one (tile_b, C) block of
    # logits fits in VMEM (true for NCE negative counts, even 16k+ classes).
    if tile_b is None:
        # As many rows per step as the double-buffered (lane-padded) VMEM
        # budget allows, but no more than needed to hit the HBM/step target.
        tile_by_vmem = _IN_DBUF_BUDGET // (2 * lane_c * itemsize)
        tile_by_hbm = _HBM_TARGET_PER_STEP // (C * itemsize)
        tile_b = max(8, min(tile_by_vmem, tile_by_hbm))
    tile_b = min(int(tile_b), B)
    if tile_b != B:
        tile_b = max(8, (tile_b // 8) * 8)  # sublane-aligned block rows
    # v7x megacore: for big batches keep >= 2 tiles on the "parallel" axis so
    # both TensorCores get work (harmless elsewhere).
    if B >= 2048 and tile_b > pl.cdiv(B, 2):
        tile_b = pl.cdiv(pl.cdiv(B, 2), 8) * 8
    num_tiles = pl.cdiv(B, tile_b)
    need_mask = (B % tile_b) != 0
    valid_rows_last = B - (num_tiles - 1) * tile_b

    cost = pl.CostEstimate(
        flops=5 * B * C,
        transcendentals=B * C + B,            # exp per element + log per row
        bytes_accessed=B * C * itemsize + num_tiles * 8 * 4,
    )

    partials = pl.pallas_call(
        functools.partial(
            _nce_softmax_loss_kernel,
            valid_rows_last=valid_rows_last,
            need_mask=need_mask,
        ),
        out_shape=jax.ShapeDtypeStruct((num_tiles, 8, 1), jnp.float32),
        grid=(num_tiles,),
        in_specs=[pl.BlockSpec((tile_b, C), lambda i: (i, 0))],
        out_specs=pl.BlockSpec((1, 8, 1), lambda i: (i, 0, 0)),
        compiler_params=pltpu.CompilerParams(
            dimension_semantics=("parallel",),
            vmem_limit_bytes=_VMEM_LIMIT_BYTES,
        ),
        cost_estimate=cost,
    )(x2)

    # Tiny final reduction over per-tile partials; divide by the TRUE batch size.
    return jnp.sum(partials) / B


def _reference_loss(x):
    x2 = x[..., 0] if (x.ndim == 3 and x.shape[-1] == 1) else x
    x2 = x2.astype(jnp.float32)
    lse = jax.scipy.special.logsumexp(x2, axis=-1)
    return jnp.mean(lse - x2[:, 0])


if __name__ == "__main__":
    root = jax.random.PRNGKey(0)
    k1, k2 = jax.random.split(root)

    # CPC-style NCE shape: 1 positive + 16 negatives, small batch.
    bsz, n_cls = 8, 17
    x = jax.random.normal(k1, (bsz, n_cls, 1), dtype=jnp.float32)
    loss = nce_softmax_loss(x)
    jax.block_until_ready(loss)
    ref = _reference_loss(x)
    assert jnp.allclose(loss, ref, rtol=1e-5, atol=1e-5), (loss, ref)

    # Exercise the multi-tile path (parallel grid, ragged last tile with
    # pl.when-gated masking, native bf16 cast in-kernel) with a forced tile.
    bsz2 = 300
    xb = jax.random.normal(k2, (bsz2, n_cls, 1), dtype=jnp.bfloat16)
    loss2 = nce_softmax_loss(xb, tile_b=128)
    jax.block_until_ready(loss2)
    ref2 = _reference_loss(xb)
    assert jnp.allclose(loss2, ref2, rtol=1e-4, atol=1e-4), (loss2, ref2)

    print("KERNEL_OK")
</pallas_src>

<mosaic_0001>
module attributes {stable_mosaic.version = 11 : i64} {
  func.func @_nce_softmax_loss_kernel(%arg0: i32, %arg1: memref<8x17xf32, #tpu.memory_space<vmem>>, %arg2: memref<1x8x1xf32, #tpu.memory_space<vmem>>) attributes {dimension_semantics = [#tpu.dimension_semantics<parallel>], iteration_bounds = array<i64: 1>, scalar_prefetch = 0 : i64, scratch_operands = 0 : i64, tpu.core_type = #tpu.core_type<tc>, window_params = [{transform_indices = @transform_0, window_bounds = array<i64: 8, 17>}, {transform_indices = @transform_1, window_bounds = array<i64: 1, 8, 1>}]} {
    %c0 = arith.constant 0 : index
    %c0_0 = arith.constant 0 : index
    %0 = vector.load %arg1[%c0, %c0_0] : memref<8x17xf32, #tpu.memory_space<vmem>>, vector<8x17xf32>
    %cst = arith.constant dense<0xFF800000> : vector<8xf32>
    %1 = vector.multi_reduction <maximumf>, %0, %cst [1] : vector<8x17xf32> to vector<8xf32>
    %2 = vector.shape_cast %1 : vector<8xf32> to vector<8x1xf32>
    %3 = vector.broadcast %2 : vector<8x1xf32> to vector<8x17xf32>
    %4 = arith.subf %0, %3 : vector<8x17xf32>
    %5 = math.exp %4 : vector<8x17xf32>
    %cst_1 = arith.constant dense<0.000000e+00> : vector<8xf32>
    %6 = vector.multi_reduction <add>, %5, %cst_1 [1] : vector<8x17xf32> to vector<8xf32>
    %7 = vector.shape_cast %6 : vector<8xf32> to vector<8x1xf32>
    %8 = math.log %7 : vector<8x1xf32>
    %9 = arith.addf %2, %8 : vector<8x1xf32>
    %10 = vector.extract_strided_slice %0 {offsets = [0, 0], sizes = [8, 1], strides = [1, 1]} : vector<8x17xf32> to vector<8x1xf32>
    %11 = arith.subf %9, %10 : vector<8x1xf32>
    %12 = vector.shape_cast %11 : vector<8x1xf32> to vector<1x8x1xf32>
    %cst_2 = arith.constant dense<0.000000e+00> : vector<1xf32>
    %13 = vector.multi_reduction <add>, %12, %cst_2 [1, 2] : vector<1x8x1xf32> to vector<1xf32>
    %14 = vector.shape_cast %13 : vector<1xf32> to vector<1x1x1xf32>
    %15 = vector.extract %14[0, 0, 0] : f32 from vector<1x1x1xf32>
    %16 = tpu.iota {dimensions = array<i32: 1>} : vector<1x8x1xi32>
    %c0_i32 = arith.constant 0 : i32
    %17 = vector.broadcast %c0_i32 : i32 to vector<1x8x1xi32>
    %18 = arith.cmpi eq, %16, %17 : vector<1x8x1xi32>
    %cst_3 = arith.constant 0.000000e+00 : f32
    %19 = vector.broadcast %15 : f32 to vector<1x8x1xf32>
    %20 = vector.broadcast %cst_3 : f32 to vector<1x8x1xf32>
    %21 = arith.select %18, %19, %20 : vector<1x8x1xi1>, vector<1x8x1xf32>
    %c0_4 = arith.constant 0 : index
    %c0_5 = arith.constant 0 : index
    %c0_6 = arith.constant 0 : index
    %22 = vector.load %arg2[%c0_4, %c0_5, %c0_6] : memref<1x8x1xf32, #tpu.memory_space<vmem>>, vector<1x8x1xf32>
    tpu.vector_store %arg2[%c0_4, %c0_5, %c0_6], %21 {strides = array<i32>} : memref<1x8x1xf32, #tpu.memory_space<vmem>>, vector<1x8x1xf32>,
    return
  }
  func.func @transform_0(%arg0: i32) -> (i32, i32) {
    %c0_i32 = arith.constant 0 : i32
    %c0_i32_0 = arith.constant 0 : i32
    return %arg0, %c0_i32 : i32, i32
  }
  func.func @transform_1(%arg0: i32) -> (i32, i32, i32) {
    %c0_i32 = arith.constant 0 : i32
    %c0_i32_0 = arith.constant 0 : i32
    %c0_i32_1 = arith.constant 0 : i32
    return %arg0, %c0_i32, %c0_i32_0 : i32, i32, i32
  }
}

</mosaic_0001>

<llo_original>
// kernel: tpu_custom_call.1
$region0: #{tpu_custom_call.1}
  #allocation0 [shape = 'u32[]', space=smem, size = 0x4, offset = 0x4, fixed_abs, tag = 'smem constant byte address 0x4 - core index']
  #allocation1 [shape = 'u32[144,128]{1,0:T(1,128)}', space=vmem, size = 0x12000, scoped, tag = 'internal scratch']
  %s0 = inlined_call_operand.hbm [shape: f32[8,17], index: 0, kind: input, shape index: {}]
  %s1 = inlined_call_operand.vmem [shape: f32[1,8,1], index: 1, kind: output, shape index: {}]
  %s2 = sld [smem:[#allocation0]]
  $region18: #{tpu_custom_call.1} parent=0
    _
  %s4 = ssub.s32 1, %s2
  %s5 = scalar_select 0, %s4, %s2
  $region1: #{tpu_custom_call.1} parent=0
    #allocation2 [shape = 'u8[4096]{0}', space=vmem, size = 0x1000, scoped, tag = 'input window, operand 0, single buffered']
    #allocation3 [shape = 's32[1]{0}', space=sflag, size = 0x4, scoped, tag = 'scoped memory for tpu_custom_call.1']
    %6 = vsyncpa [#allocation3], 0
    // Predicated region
    $region2: #{tpu_custom_call.1} parent=1 // pred_check
      _
    $region3: #{tpu_custom_call.1} parent=1 // pred_check_branch
      %8 = sbr.rel (0) target = $region5
    $region4: #{tpu_custom_call.1} parent=1 // pred_region
      %s10 = ssub.s32 128, 128
      %11 = vsyncadd [#allocation3], %s10
      %s13 = sshll.u32 [#allocation2], 4
      %s14 = int_to_ptr.vmem [resolvable:$true] %s13
      %16 = dma.hbm_to_vmem [thread:$0]  %s0, 128, %s14, [#allocation3]
    $region5: #{tpu_custom_call.1} parent=1 // pred_fallthru
      _
    // Predicated region
    $region6: #{tpu_custom_call.1} parent=1 // pred_check
      _
    $region7: #{tpu_custom_call.1} parent=1 // pred_check_branch
      %18 = sbr.rel (0) target = $region9
    $region8: #{tpu_custom_call.1} parent=1 // pred_region
      %19 = dma.done [#allocation3], 128
    $region9: #{tpu_custom_call.1} parent=1 // pred_fallthru
      _
    %v20 = vld [vmem:[#allocation2] sm:$0xff]
    %vm21 = vcmask 138240
    %v22 = vsel %vm21, %v20, -inf
    %23 = vmax.xlane.f32.xlu0 %v22
    %v24 = vpop.xlane.xlu0 %23
    %v25 = vsub.f32 %v20, %v24
    %v26 = vmul.f32 %v25, 1.442695
    %v27 = vpow.pop %v26
    %v28 = vsel %vm21, %v27, 0.0
    %29 = vadd.xlane.f32.xlu0 %v28
    %v30 = vpop.xlane.xlu0 %29
    %v31 = vlog2.pop %v30
    %v32 = vmul.f32 %v31, 0.6931472
    %v33 = vadd.f32 %v24, %v32
    %v34 = vsub.f32 %v33, %v20
    %vm35 = vcmask 7168
    %v36 = vsel %vm35, %v34, 0.0
    %37 = vadd.xlane.f32.xlu0 %v36
    %v38 = vpop.xlane.xlu0 %37
    %v39 = vrot.slane %v38, 4
    %v40 = vadd.f32 %v38, %v39
    %v41 = vrot.slane %v40, 2
    %v42 = vadd.f32 %v40, %v41
    %v43 = vrot.slane %v42, 1
    %v44 = vadd.f32 %v42, %v43
    %s45 = vtos %v44
    %v46 = vlaneseq
    %v47 = vshrl.u32 %v46, 7
    %vm48 = vcmp.eq.s32.totalorder %v47, 0
    %v49 = vstv %s45
    %v50 = vsel %vm48, %v49, 0.0
    %51 = vst.msk [vmem:[%s1] sm:$0xff] %vm35, %v50
    // Predicated region
    $region10: #{tpu_custom_call.1} parent=1 // pred_check
      _
    $region11: #{tpu_custom_call.1} parent=1 // pred_check_branch
      %53 = sbr.rel (0) target = $region13
    $region12: #{tpu_custom_call.1} parent=1 // pred_region
      _
    $region13: #{tpu_custom_call.1} parent=1 // pred_fallthru
      _
    // Predicated region
    $region14: #{tpu_custom_call.1} parent=1 // pred_check
      _
    $region15: #{tpu_custom_call.1} parent=1 // pred_check_branch
      %55 = sbr.rel (0) target = $region17
    $region16: #{tpu_custom_call.1} parent=1 // pred_region
      _
    $region17: #{tpu_custom_call.1} parent=1 // pred_fallthru
      _
    %56 = vsyncpa [#allocation3], 1

</llo_original>
